<compile_context>
chip_gen: v7x
topology: tpu7x:2x2x1
jax: 0.10.0
libtpu: 0.0.40
codegen_flags: <defaults>
</compile_context>

<pallas_src>
import functools

import jax
import jax.numpy as jnp
from jax import lax
from jax.experimental import pallas as pl
from jax.experimental.pallas import tpu as pltpu

INPUT_SIZE = 5        # matches nn.Linear(input_size, 3) in __init__ (unused in forward)
NUM_CLASSES = 3
_LANES = 128
_VIEW_COLS = NUM_CLASSES * _LANES   # 384: one 128-row group of class-interleaved logits
_DEFAULT_TB = 512                   # view-rows per tile  -> 65536 logit rows / grid step
_PALLAS_MIN_ROWS = 512              # below this (or ragged N) the jnp path is faster


def _init_unused_linear_params(key):
    """Deterministic init of the module's nn.Linear(input_size, 3) params.

    Created in __init__ but never used by forward(); materialized only for fidelity.
    """
    kw, kb = jax.random.split(key)
    bound = 1.0 / jnp.sqrt(INPUT_SIZE)
    w = jax.random.uniform(kw, (NUM_CLASSES, INPUT_SIZE), jnp.float32, -bound, bound)
    b = jax.random.uniform(kb, (NUM_CLASSES,), jnp.float32, -bound, bound)
    return w, b


# -----------------------------------------------------------------------------
# Cross-entropy kernel, flat lane-dense layout (no wrapper transpose / pad).
#   x_ref : (tb, 384) f32  — lane p of sublane s holds logit[row = base + p//3, class p%3]
#   y_ref : (tb, 128) i32  — lane q of sublane s holds the label of row base + q
#   o_ref : (1, 384)  f32  — per-tile lane-wide partial sum of (logsumexp - picked)
# Grid = (num_tiles,), each step writes its own partial block ("parallel").
# -----------------------------------------------------------------------------
def _ce_kernel(x_ref, y_ref, o_ref, *, n_rows):
    tb = x_ref.shape[0]
    t = pl.program_id(0)

    x = x_ref[...]                                          # (tb, 384) f32
    y = y_ref[...]                                          # (tb, 128) i32

    # -- which logit rows of this tile are real (n_rows baked in statically) --
    sub = lax.broadcasted_iota(jnp.int32, (tb, _LANES), 0)
    lq = lax.broadcasted_iota(jnp.int32, (tb, _LANES), 1)
    row = (t * tb + sub) * _LANES + lq
    valid = row < n_rows                                    # (tb, 128)

    # -- scatter labels to the 3 lanes of their row's group with an exact bf16 matmul --
    # E[q, 3q + c] = 1 (c in 0..2)  =>  y3[s, 3q+c] = label[s, q]  (-1 for invalid rows)
    qi = lax.broadcasted_iota(jnp.int32, (_LANES, _VIEW_COLS), 0)
    ji = lax.broadcasted_iota(jnp.int32, (_LANES, _VIEW_COLS), 1)
    d = ji - 3 * qi
    band = jnp.logical_and(d >= 0, d < 3)                   # (128, 384)
    expand = jnp.where(band, 1.0, 0.0).astype(jnp.bfloat16)
    ym = jnp.where(valid, y.astype(jnp.float32), -1.0).astype(jnp.bfloat16)
    y3 = jnp.dot(ym, expand, preferred_element_type=jnp.float32)   # (tb, 384), exact
    v3 = y3 >= 0.0                                          # row validity at all 3 lanes

    # lane class pattern (p % 3) as a (1, 384) row, also via an exact tiny matmul
    # (avoids integer remainder; only guaranteed-supported ops).
    dlane = jnp.where(band, d.astype(jnp.float32), 0.0).astype(jnp.bfloat16)
    cls = jnp.dot(jnp.ones((1, _LANES), jnp.bfloat16), dlane,
                  preferred_element_type=jnp.float32)       # (1, 384) in {0., 1., 2.}

    onehot = y3 == cls                                      # true exactly at x[row, y[row]]

    # -- per-row logsumexp, evaluated at the middle lane of each 3-lane group --
    # Using both roll directions makes this independent of the roll sign convention,
    # and middle lanes never touch the circular wrap (384 % 3 == 0).
    nb_a = pltpu.roll(x, 1, 1)
    nb_b = pltpu.roll(x, _VIEW_COLS - 1, 1)                 # == shift of -1
    m = jnp.maximum(x, jnp.maximum(nb_a, nb_b))
    lse = m + jnp.log(jnp.exp(x - m) + jnp.exp(nb_a - m) + jnp.exp(nb_b - m))

    is_mid = cls == 1.0                                     # (1, 384)
    contrib = (jnp.where(jnp.logical_and(is_mid, v3), lse, 0.0)
               - jnp.where(onehot, x, 0.0))                 # (tb, 384)

    # lane-wide per-tile partial; the single cross-lane reduce happens outside.
    o_ref[...] = jnp.sum(contrib, axis=0, keepdims=True)    # (1, 384)


@functools.partial(jax.jit, static_argnames=("tb",))
def _ce_loss_pallas(x, y, *, tb=_DEFAULT_TB):
    """Mean cross-entropy for logits x (N, 3), int labels y (N,); requires N % 128 == 0."""
    n, c = x.shape
    assert c == NUM_CLASSES and n > 0 and n % _LANES == 0

    r = n // _LANES
    # free row-major views: no transpose, no pad, no extra HBM pass over x
    xv = x.astype(jnp.float32).reshape(r, _VIEW_COLS)
    yv = y.astype(jnp.int32).reshape(r, _LANES)

    tb_eff = min(tb, r)                      # multiple of 8, or the full (ragged) extent
    assert tb_eff == r or tb_eff % 8 == 0
    grid = pl.cdiv(r, tb_eff)

    partials = pl.pallas_call(
        functools.partial(_ce_kernel, n_rows=n),
        out_shape=jax.ShapeDtypeStruct((grid, _VIEW_COLS), jnp.float32),
        grid=(grid,),
        in_specs=[
            pl.BlockSpec((tb_eff, _VIEW_COLS), lambda t: (t, 0)),
            pl.BlockSpec((tb_eff, _LANES), lambda t: (t, 0)),
        ],
        out_specs=pl.BlockSpec((1, _VIEW_COLS), lambda t: (t, 0)),
        compiler_params=pltpu.CompilerParams(
            dimension_semantics=("parallel",),
            vmem_limit_bytes=32 * 1024 * 1024,
        ),
        cost_estimate=pl.CostEstimate(
            flops=70 * n + 2 * 2 * _VIEW_COLS * n,          # vector ops + label-expand matmuls
            transcendentals=12 * n,
            bytes_accessed=(NUM_CLASSES * 4 + 4) * n + grid * _VIEW_COLS * 4,
        ),
    )(xv, yv)

    return jnp.sum(partials) / n


@jax.jit
def _ce_loss_jnp(x, y):
    """Small / ragged-N fast path: plain jnp cross-entropy."""
    x = x.astype(jnp.float32)
    lse = jax.nn.logsumexp(x, axis=-1)
    picked = jnp.take_along_axis(x, y.astype(jnp.int32)[:, None], axis=-1)[:, 0]
    return jnp.mean(lse - picked)


def cross_entropy_loss(x, y):
    """Mean CE over logits x (N, 3) and integer class targets y (N,)."""
    n = x.shape[0]
    if n >= _PALLAS_MIN_ROWS and n % _LANES == 0:
        return _ce_loss_pallas(x, y)
    return _ce_loss_jnp(x, y)


def torch_model_forward(x, y=None):
    """Pallas/JAX equivalent of TorchModel.forward (self.linear / sigmoid unused there)."""
    if y is not None:
        return cross_entropy_loss(x, y)
    return x  # identity path: no kernel, no HBM round trip


if __name__ == "__main__":
    key = jax.random.PRNGKey(0)
    k_param, kx1, ky1, kx2, ky2, kx3, ky3 = jax.random.split(key, 7)

    # unused-by-forward nn.Linear params, initialized deterministically for fidelity
    _w, _b = _init_unused_linear_params(k_param)

    # --- kernel path: N multiple of 128 (single tile) ---
    n1 = 1024
    x1 = jax.random.normal(kx1, (n1, NUM_CLASSES), dtype=jnp.float32)
    y1 = jax.random.randint(ky1, (n1,), 0, NUM_CLASSES, dtype=jnp.int32)
    loss1 = jax.block_until_ready(torch_model_forward(x1, y1))
    ref1 = jnp.mean(jax.nn.logsumexp(x1, axis=-1) - x1[jnp.arange(n1), y1])
    assert jnp.allclose(loss1, ref1, atol=1e-5, rtol=1e-5), (loss1, ref1)

    # --- kernel path: multiple tiles + ragged last tile (tb=8 view-rows) ---
    n2 = 2560                                 # 20 view-rows -> 3 tiles of 8, last ragged
    x2 = jax.random.normal(kx2, (n2, NUM_CLASSES), dtype=jnp.float32)
    y2 = jax.random.randint(ky2, (n2,), 0, NUM_CLASSES, dtype=jnp.int32)
    loss2 = jax.block_until_ready(_ce_loss_pallas(x2, y2, tb=8))
    ref2 = jnp.mean(jax.nn.logsumexp(x2, axis=-1) - x2[jnp.arange(n2), y2])
    assert jnp.allclose(loss2, ref2, atol=1e-5, rtol=1e-5), (loss2, ref2)

    # --- small-N fast path (plain jnp) ---
    n3 = 8
    x3 = jax.random.normal(kx3, (n3, NUM_CLASSES), dtype=jnp.float32)
    y3 = jax.random.randint(ky3, (n3,), 0, NUM_CLASSES, dtype=jnp.int32)
    loss3 = jax.block_until_ready(torch_model_forward(x3, y3))
    ref3 = jnp.mean(jax.nn.logsumexp(x3, axis=-1) - x3[jnp.arange(n3), y3])
    assert jnp.allclose(loss3, ref3, atol=1e-5, rtol=1e-5), (loss3, ref3)

    # --- identity path (y is None) ---
    out = jax.block_until_ready(torch_model_forward(x1))
    assert jnp.allclose(out, x1), "identity path mismatch"

    print("KERNEL_OK")
</pallas_src>

<mosaic_0001>
module attributes {stable_mosaic.version = 11 : i64} {
  func.func @_ce_kernel(%arg0: i32, %arg1: memref<8x384xf32, #tpu.memory_space<vmem>>, %arg2: memref<8x128xi32, #tpu.memory_space<vmem>>, %arg3: memref<1x384xf32, #tpu.memory_space<vmem>>) attributes {dimension_semantics = [#tpu.dimension_semantics<parallel>], iteration_bounds = array<i64: 1>, scalar_prefetch = 0 : i64, scratch_operands = 0 : i64, tpu.core_type = #tpu.core_type<tc>, window_params = [{transform_indices = @transform_0, window_bounds = array<i64: 8, 384>}, {transform_indices = @transform_1, window_bounds = array<i64: 8, 128>}, {transform_indices = @transform_2, window_bounds = array<i64: 1, 384>}]} {
    %c0 = arith.constant 0 : index
    %c0_0 = arith.constant 0 : index
    %0 = vector.load %arg1[%c0, %c0_0] : memref<8x384xf32, #tpu.memory_space<vmem>>, vector<8x384xf32>
    %c0_1 = arith.constant 0 : index
    %c0_2 = arith.constant 0 : index
    %1 = vector.load %arg2[%c0_1, %c0_2] : memref<8x128xi32, #tpu.memory_space<vmem>>, vector<8x128xi32>
    %2 = tpu.iota {dimensions = array<i32: 0>} : vector<8x128xi32>
    %3 = tpu.iota {dimensions = array<i32: 1>} : vector<8x128xi32>
    %c8_i32 = arith.constant 8 : i32
    %4 = arith.muli %arg0, %c8_i32 : i32
    %5 = vector.broadcast %4 : i32 to vector<8x128xi32>
    %6 = arith.addi %5, %2 : vector<8x128xi32>
    %c128_i32 = arith.constant 128 : i32
    %7 = vector.broadcast %c128_i32 : i32 to vector<8x128xi32>
    %8 = arith.muli %6, %7 : vector<8x128xi32>
    %9 = arith.addi %8, %3 : vector<8x128xi32>
    %c1024_i32 = arith.constant 1024 : i32
    %10 = vector.broadcast %c1024_i32 : i32 to vector<8x128xi32>
    %11 = arith.cmpi slt, %9, %10 : vector<8x128xi32>
    %12 = tpu.iota {dimensions = array<i32: 0>} : vector<128x384xi32>
    %13 = tpu.iota {dimensions = array<i32: 1>} : vector<128x384xi32>
    %c3_i32 = arith.constant 3 : i32
    %14 = vector.broadcast %c3_i32 : i32 to vector<128x384xi32>
    %15 = arith.muli %14, %12 : vector<128x384xi32>
    %16 = arith.subi %13, %15 : vector<128x384xi32>
    %c0_i32 = arith.constant 0 : i32
    %17 = vector.broadcast %c0_i32 : i32 to vector<128x384xi32>
    %18 = arith.cmpi sge, %16, %17 : vector<128x384xi32>
    %c3_i32_3 = arith.constant 3 : i32
    %19 = vector.broadcast %c3_i32_3 : i32 to vector<128x384xi32>
    %20 = arith.cmpi slt, %16, %19 : vector<128x384xi32>
    %21 = arith.andi %18, %20 : vector<128x384xi1>
    %cst = arith.constant 1.000000e+00 : f32
    %cst_4 = arith.constant 0.000000e+00 : f32
    %22 = vector.broadcast %cst : f32 to vector<128x384xf32>
    %23 = vector.broadcast %cst_4 : f32 to vector<128x384xf32>
    %24 = arith.select %21, %22, %23 : vector<128x384xi1>, vector<128x384xf32>
    %25 = arith.truncf %24 : vector<128x384xf32> to vector<128x384xbf16>
    %26 = arith.sitofp %1 : vector<8x128xi32> to vector<8x128xf32>
    %cst_5 = arith.constant -1.000000e+00 : f32
    %27 = vector.broadcast %cst_5 : f32 to vector<8x128xf32>
    %28 = arith.select %11, %26, %27 : vector<8x128xi1>, vector<8x128xf32>
    %29 = arith.truncf %28 : vector<8x128xf32> to vector<8x128xbf16>
    %cst_6 = arith.constant dense<0.000000e+00> : vector<8x384xf32>
    %30 = tpu.matmul %29, %25, %cst_6 {dimension_numbers = #tpu.dot_dimension_numbers<[1], [0], [0], [1], [0, 0, 1, 1], [], []>} : vector<8x128xbf16>, vector<128x384xbf16>, vector<8x384xf32> -> vector<8x384xf32>
    %cst_7 = arith.constant 0.000000e+00 : f32
    %31 = vector.broadcast %cst_7 : f32 to vector<8x384xf32>
    %32 = arith.cmpf oge, %30, %31 : vector<8x384xf32>
    %33 = arith.sitofp %16 : vector<128x384xi32> to vector<128x384xf32>
    %cst_8 = arith.constant 0.000000e+00 : f32
    %34 = vector.broadcast %cst_8 : f32 to vector<128x384xf32>
    %35 = arith.select %21, %33, %34 : vector<128x384xi1>, vector<128x384xf32>
    %36 = arith.truncf %35 : vector<128x384xf32> to vector<128x384xbf16>
    %cst_9 = arith.constant 1.000000e+00 : bf16
    %37 = vector.broadcast %cst_9 : bf16 to vector<1x128xbf16>
    %cst_10 = arith.constant dense<0.000000e+00> : vector<1x384xf32>
    %38 = tpu.matmul %37, %36, %cst_10 {dimension_numbers = #tpu.dot_dimension_numbers<[1], [0], [0], [1], [0, 0, 1, 1], [], []>} : vector<1x128xbf16>, vector<128x384xbf16>, vector<1x384xf32> -> vector<1x384xf32>
    %39 = vector.broadcast %38 : vector<1x384xf32> to vector<8x384xf32>
    %40 = arith.cmpf oeq, %30, %39 : vector<8x384xf32>
    %c1_i32 = arith.constant 1 : i32
    %41 = tpu.dynamic_rotate %0 by %c1_i32 dim 1 : vector<8x384xf32>, i32 -> vector<8x384xf32>
    %c383_i32 = arith.constant 383 : i32
    %42 = tpu.dynamic_rotate %0 by %c383_i32 dim 1 : vector<8x384xf32>, i32 -> vector<8x384xf32>
    %43 = arith.maximumf %41, %42 : vector<8x384xf32>
    %44 = arith.maximumf %0, %43 : vector<8x384xf32>
    %45 = arith.subf %0, %44 : vector<8x384xf32>
    %46 = math.exp %45 : vector<8x384xf32>
    %47 = arith.subf %41, %44 : vector<8x384xf32>
    %48 = math.exp %47 : vector<8x384xf32>
    %49 = arith.addf %46, %48 : vector<8x384xf32>
    %50 = arith.subf %42, %44 : vector<8x384xf32>
    %51 = math.exp %50 : vector<8x384xf32>
    %52 = arith.addf %49, %51 : vector<8x384xf32>
    %53 = math.log %52 : vector<8x384xf32>
    %54 = arith.addf %44, %53 : vector<8x384xf32>
    %cst_11 = arith.constant 1.000000e+00 : f32
    %55 = vector.broadcast %cst_11 : f32 to vector<1x384xf32>
    %56 = arith.cmpf oeq, %38, %55 : vector<1x384xf32>
    %57 = vector.broadcast %56 : vector<1x384xi1> to vector<8x384xi1>
    %58 = arith.andi %57, %32 : vector<8x384xi1>
    %cst_12 = arith.constant 0.000000e+00 : f32
    %59 = vector.broadcast %cst_12 : f32 to vector<8x384xf32>
    %60 = arith.select %58, %54, %59 : vector<8x384xi1>, vector<8x384xf32>
    %cst_13 = arith.constant 0.000000e+00 : f32
    %61 = vector.broadcast %cst_13 : f32 to vector<8x384xf32>
    %62 = arith.select %40, %0, %61 : vector<8x384xi1>, vector<8x384xf32>
    %63 = arith.subf %60, %62 : vector<8x384xf32>
    %cst_14 = arith.constant dense<0.000000e+00> : vector<384xf32>
    %64 = vector.multi_reduction <add>, %63, %cst_14 [0] : vector<8x384xf32> to vector<384xf32>
    %65 = vector.shape_cast %64 : vector<384xf32> to vector<1x384xf32>
    %c0_15 = arith.constant 0 : index
    %c0_16 = arith.constant 0 : index
    %66 = vector.load %arg3[%c0_15, %c0_16] : memref<1x384xf32, #tpu.memory_space<vmem>>, vector<1x384xf32>
    tpu.vector_store %arg3[%c0_15, %c0_16], %65 {strides = array<i32>} : memref<1x384xf32, #tpu.memory_space<vmem>>, vector<1x384xf32>,
    return
  }
  func.func @transform_0(%arg0: i32) -> (i32, i32) {
    %c0_i32 = arith.constant 0 : i32
    %c0_i32_0 = arith.constant 0 : i32
    return %arg0, %c0_i32 : i32, i32
  }
  func.func @transform_1(%arg0: i32) -> (i32, i32) {
    %c0_i32 = arith.constant 0 : i32
    %c0_i32_0 = arith.constant 0 : i32
    return %arg0, %c0_i32 : i32, i32
  }
  func.func @transform_2(%arg0: i32) -> (i32, i32) {
    %c0_i32 = arith.constant 0 : i32
    %c0_i32_0 = arith.constant 0 : i32
    return %arg0, %c0_i32 : i32, i32
  }
}

</mosaic_0001>

<llo_original>
// kernel: _ce_loss_pallas.1
$region0: #{_ce_loss_pallas.1}
  #allocation0 [shape = 'u32[]', space=smem, size = 0x4, offset = 0x4, fixed_abs, tag = 'smem constant byte address 0x4 - core index']
  #allocation1 [shape = 'u32[144,128]{1,0:T(1,128)}', space=vmem, size = 0x12000, scoped, tag = 'internal scratch']
  %s0 = inlined_call_operand.vmem [shape: f32[8,384], index: 0, kind: input, shape index: {}]
  %s1 = inlined_call_operand.vmem [shape: s32[8,128], index: 1, kind: input, shape index: {}]
  %s2 = inlined_call_operand.vmem [shape: f32[1,384], index: 2, kind: output, shape index: {}]
  %s3 = sld [smem:[#allocation0]]
  $region18: #{_ce_loss_pallas.1} parent=0
    _
  %s5 = ssub.s32 1, %s3
  %s6 = scalar_select 0, %s5, %s3
  // Predicated region
  $region2: #{_ce_loss_pallas.1} parent=0 // pred_check
    _
  $region3: #{_ce_loss_pallas.1} parent=0 // pred_check_branch
    %8 = sbr.rel (0) target = $region5
  $region4: #{_ce_loss_pallas.1} parent=0 // pred_region
    _
  $region5: #{_ce_loss_pallas.1} parent=0 // pred_fallthru
    _
  // Predicated region
  $region6: #{_ce_loss_pallas.1} parent=0 // pred_check
    _
  $region7: #{_ce_loss_pallas.1} parent=0 // pred_check_branch
    %10 = sbr.rel (0) target = $region9
  $region8: #{_ce_loss_pallas.1} parent=0 // pred_region
    _
  $region9: #{_ce_loss_pallas.1} parent=0 // pred_fallthru
    _
  %v13 = vld [vmem:[%s0] sm:$0xff]
  %v14 = vld [vmem:[%s0 + $0x8] sm:$0xff]
  %v15 = vld [vmem:[%s0 + $0x10] sm:$0xff]
  %v16 = vld [vmem:[%s1] sm:$0xff]
  %v17 = vlaneseq
  %v18 = vshrl.u32 %v17, 7
  %v19 = vlaneseq
  %v20 = vand.u32 %v19, 127
  %s21 = smul.u32 0, 8
  %v22 = vstv %s21
  %v23 = vadd.s32 %v22, %v18
  %v24 = vmul.u32 %v23, 128
  %v25 = vadd.s32 %v24, %v20
  %vm26 = vcmp.lt.s32.totalorder %v25, 1024
  %v27 = vadd.s32 %v18, 8
  %v28 = vadd.s32 %v18, 16
  %v29 = vadd.s32 %v18, 24
  %v30 = vadd.s32 %v18, 32
  %v31 = vadd.s32 %v18, 40
  %v32 = vadd.s32 %v18, 48
  %v33 = vadd.s32 %v18, 56
  %v34 = vadd.s32 %v18, 64
  %v35 = vadd.s32 %v18, 72
  %v36 = vadd.s32 %v18, 80
  %v37 = vadd.s32 %v18, 88
  %v38 = vadd.s32 %v18, 96
  %v39 = vadd.s32 %v18, 104
  %v40 = vadd.s32 %v18, 112
  %v41 = vadd.s32 %v18, 120
  %v42 = vadd.s32 %v20, 128
  %v43 = vadd.s32 %v20, 256
  %v44 = vmul.u32 %v18, 3
  %v45 = vmul.u32 %v27, 3
  %v46 = vmul.u32 %v28, 3
  %v47 = vmul.u32 %v29, 3
  %v48 = vmul.u32 %v30, 3
  %v49 = vmul.u32 %v31, 3
  %v50 = vmul.u32 %v32, 3
  %v51 = vmul.u32 %v33, 3
  %v52 = vmul.u32 %v34, 3
  %v53 = vmul.u32 %v35, 3
  %v54 = vmul.u32 %v36, 3
  %v55 = vmul.u32 %v37, 3
  %v56 = vmul.u32 %v38, 3
  %v57 = vmul.u32 %v39, 3
  %v58 = vmul.u32 %v40, 3
  %v59 = vmul.u32 %v41, 3
  %v60 = vsub.s32 %v20, %v44
  %v61 = vsub.s32 %v42, %v44
  %v62 = vsub.s32 %v43, %v44
  %v63 = vsub.s32 %v20, %v45
  %v64 = vsub.s32 %v42, %v45
  %v65 = vsub.s32 %v43, %v45
  %v66 = vsub.s32 %v20, %v46
  %v67 = vsub.s32 %v42, %v46
  %v68 = vsub.s32 %v43, %v46
  %v69 = vsub.s32 %v20, %v47
  %v70 = vsub.s32 %v42, %v47
  %v71 = vsub.s32 %v43, %v47
  %v72 = vsub.s32 %v20, %v48
  %v73 = vsub.s32 %v42, %v48
  %v74 = vsub.s32 %v43, %v48
  %v75 = vsub.s32 %v20, %v49
  %v76 = vsub.s32 %v42, %v49
  %v77 = vsub.s32 %v43, %v49
  %v78 = vsub.s32 %v20, %v50
  %v79 = vsub.s32 %v42, %v50
  %v80 = vsub.s32 %v43, %v50
  %v81 = vsub.s32 %v20, %v51
  %v82 = vsub.s32 %v42, %v51
  %v83 = vsub.s32 %v43, %v51
  %v84 = vsub.s32 %v20, %v52
  %v85 = vsub.s32 %v42, %v52
  %v86 = vsub.s32 %v43, %v52
  %v87 = vsub.s32 %v20, %v53
  %v88 = vsub.s32 %v42, %v53
  %v89 = vsub.s32 %v43, %v53
  %v90 = vsub.s32 %v20, %v54
  %v91 = vsub.s32 %v42, %v54
  %v92 = vsub.s32 %v43, %v54
  %v93 = vsub.s32 %v20, %v55
  %v94 = vsub.s32 %v42, %v55
  %v95 = vsub.s32 %v43, %v55
  %v96 = vsub.s32 %v20, %v56
  %v97 = vsub.s32 %v42, %v56
  %v98 = vsub.s32 %v43, %v56
  %v99 = vsub.s32 %v20, %v57
  %v100 = vsub.s32 %v42, %v57
  %v101 = vsub.s32 %v43, %v57
  %v102 = vsub.s32 %v20, %v58
  %v103 = vsub.s32 %v42, %v58
  %v104 = vsub.s32 %v43, %v58
  %v105 = vsub.s32 %v20, %v59
  %v106 = vsub.s32 %v42, %v59
  %v107 = vsub.s32 %v43, %v59
  %vm108 = vcmp.ge.s32.totalorder %v60, 0
  %vm109 = vcmp.ge.s32.totalorder %v61, 0
  %vm110 = vcmp.ge.s32.totalorder %v62, 0
  %vm111 = vcmp.ge.s32.totalorder %v63, 0
  %vm112 = vcmp.ge.s32.totalorder %v64, 0
  %vm113 = vcmp.ge.s32.totalorder %v65, 0
  %vm114 = vcmp.ge.s32.totalorder %v66, 0
  %vm115 = vcmp.ge.s32.totalorder %v67, 0
  %vm116 = vcmp.ge.s32.totalorder %v68, 0
  %vm117 = vcmp.ge.s32.totalorder %v69, 0
  %vm118 = vcmp.ge.s32.totalorder %v70, 0
  %vm119 = vcmp.ge.s32.totalorder %v71, 0
  %vm120 = vcmp.ge.s32.totalorder %v72, 0
  %vm121 = vcmp.ge.s32.totalorder %v73, 0
  %vm122 = vcmp.ge.s32.totalorder %v74, 0
  %vm123 = vcmp.ge.s32.totalorder %v75, 0
  %vm124 = vcmp.ge.s32.totalorder %v76, 0
  %vm125 = vcmp.ge.s32.totalorder %v77, 0
  %vm126 = vcmp.ge.s32.totalorder %v78, 0
  %vm127 = vcmp.ge.s32.totalorder %v79, 0
  %vm128 = vcmp.ge.s32.totalorder %v80, 0
  %vm129 = vcmp.ge.s32.totalorder %v81, 0
  %vm130 = vcmp.ge.s32.totalorder %v82, 0
  %vm131 = vcmp.ge.s32.totalorder %v83, 0
  %vm132 = vcmp.ge.s32.totalorder %v84, 0
  %vm133 = vcmp.ge.s32.totalorder %v85, 0
  %vm134 = vcmp.ge.s32.totalorder %v86, 0
  %vm135 = vcmp.ge.s32.totalorder %v87, 0
  %vm136 = vcmp.ge.s32.totalorder %v88, 0
  %vm137 = vcmp.ge.s32.totalorder %v89, 0
  %vm138 = vcmp.ge.s32.totalorder %v90, 0
  %vm139 = vcmp.ge.s32.totalorder %v91, 0
  %vm140 = vcmp.ge.s32.totalorder %v92, 0
  %vm141 = vcmp.ge.s32.totalorder %v93, 0
  %vm142 = vcmp.ge.s32.totalorder %v94, 0
  %vm143 = vcmp.ge.s32.totalorder %v95, 0
  %vm144 = vcmp.ge.s32.totalorder %v96, 0
  %vm145 = vcmp.ge.s32.totalorder %v97, 0
  %vm146 = vcmp.ge.s32.totalorder %v98, 0
  %vm147 = vcmp.ge.s32.totalorder %v99, 0
  %vm148 = vcmp.ge.s32.totalorder %v100, 0
  %vm149 = vcmp.ge.s32.totalorder %v101, 0
  %vm150 = vcmp.ge.s32.totalorder %v102, 0
  %vm151 = vcmp.ge.s32.totalorder %v103, 0
  %vm152 = vcmp.ge.s32.totalorder %v104, 0
  %vm153 = vcmp.ge.s32.totalorder %v105, 0
  %vm154 = vcmp.ge.s32.totalorder %v106, 0
  %vm155 = vcmp.ge.s32.totalorder %v107, 0
  %vm156 = vcmp.lt.s32.totalorder %v60, 3
  %vm157 = vcmp.lt.s32.totalorder %v61, 3
  %vm158 = vcmp.lt.s32.totalorder %v62, 3
  %vm159 = vcmp.lt.s32.totalorder %v63, 3
  %vm160 = vcmp.lt.s32.totalorder %v64, 3
  %vm161 = vcmp.lt.s32.totalorder %v65, 3
  %vm162 = vcmp.lt.s32.totalorder %v66, 3
  %vm163 = vcmp.lt.s32.totalorder %v67, 3
  %vm164 = vcmp.lt.s32.totalorder %v68, 3
  %vm165 = vcmp.lt.s32.totalorder %v69, 3
  %vm166 = vcmp.lt.s32.totalorder %v70, 3
  %vm167 = vcmp.lt.s32.totalorder %v71, 3
  %vm168 = vcmp.lt.s32.totalorder %v72, 3
  %vm169 = vcmp.lt.s32.totalorder %v73, 3
  %vm170 = vcmp.lt.s32.totalorder %v74, 3
  %vm171 = vcmp.lt.s32.totalorder %v75, 3
  %vm172 = vcmp.lt.s32.totalorder %v76, 3
  %vm173 = vcmp.lt.s32.totalorder %v77, 3
  %vm174 = vcmp.lt.s32.totalorder %v78, 3
  %vm175 = vcmp.lt.s32.totalorder %v79, 3
  %vm176 = vcmp.lt.s32.totalorder %v80, 3
  %vm177 = vcmp.lt.s32.totalorder %v81, 3
  %vm178 = vcmp.lt.s32.totalorder %v82, 3
  %vm179 = vcmp.lt.s32.totalorder %v83, 3
  %vm180 = vcmp.lt.s32.totalorder %v84, 3
  %vm181 = vcmp.lt.s32.totalorder %v85, 3
  %vm182 = vcmp.lt.s32.totalorder %v86, 3
  %vm183 = vcmp.lt.s32.totalorder %v87, 3
  %vm184 = vcmp.lt.s32.totalorder %v88, 3
  %vm185 = vcmp.lt.s32.totalorder %v89, 3
  %vm186 = vcmp.lt.s32.totalorder %v90, 3
  %vm187 = vcmp.lt.s32.totalorder %v91, 3
  %vm188 = vcmp.lt.s32.totalorder %v92, 3
  %vm189 = vcmp.lt.s32.totalorder %v93, 3
  %vm190 = vcmp.lt.s32.totalorder %v94, 3
  %vm191 = vcmp.lt.s32.totalorder %v95, 3
  %vm192 = vcmp.lt.s32.totalorder %v96, 3
  %vm193 = vcmp.lt.s32.totalorder %v97, 3
  %vm194 = vcmp.lt.s32.totalorder %v98, 3
  %vm195 = vcmp.lt.s32.totalorder %v99, 3
  %vm196 = vcmp.lt.s32.totalorder %v100, 3
  %vm197 = vcmp.lt.s32.totalorder %v101, 3
  %vm198 = vcmp.lt.s32.totalorder %v102, 3
  %vm199 = vcmp.lt.s32.totalorder %v103, 3
  %vm200 = vcmp.lt.s32.totalorder %v104, 3
  %vm201 = vcmp.lt.s32.totalorder %v105, 3
  %vm202 = vcmp.lt.s32.totalorder %v106, 3
  %vm203 = vcmp.lt.s32.totalorder %v107, 3
  %vm204 = vmand %vm108, %vm156
  %vm205 = vmand %vm109, %vm157
  %vm206 = vmand %vm110, %vm158
  %vm207 = vmand %vm111, %vm159
  %vm208 = vmand %vm112, %vm160
  %vm209 = vmand %vm113, %vm161
  %vm210 = vmand %vm114, %vm162
  %vm211 = vmand %vm115, %vm163
  %vm212 = vmand %vm116, %vm164
  %vm213 = vmand %vm117, %vm165
  %vm214 = vmand %vm118, %vm166
  %vm215 = vmand %vm119, %vm167
  %vm216 = vmand %vm120, %vm168
  %vm217 = vmand %vm121, %vm169
  %vm218 = vmand %vm122, %vm170
  %vm219 = vmand %vm123, %vm171
  %vm220 = vmand %vm124, %vm172
  %vm221 = vmand %vm125, %vm173
  %vm222 = vmand %vm126, %vm174
  %vm223 = vmand %vm127, %vm175
  %vm224 = vmand %vm128, %vm176
  %vm225 = vmand %vm129, %vm177
  %vm226 = vmand %vm130, %vm178
  %vm227 = vmand %vm131, %vm179
  %vm228 = vmand %vm132, %vm180
  %vm229 = vmand %vm133, %vm181
  %vm230 = vmand %vm134, %vm182
  %vm231 = vmand %vm135, %vm183
  %vm232 = vmand %vm136, %vm184
  %vm233 = vmand %vm137, %vm185
  %vm234 = vmand %vm138, %vm186
  %vm235 = vmand %vm139, %vm187
  %vm236 = vmand %vm140, %vm188
  %vm237 = vmand %vm141, %vm189
  %vm238 = vmand %vm142, %vm190
  %vm239 = vmand %vm143, %vm191
  %vm240 = vmand %vm144, %vm192
  %vm241 = vmand %vm145, %vm193
  %vm242 = vmand %vm146, %vm194
  %vm243 = vmand %vm147, %vm195
  %vm244 = vmand %vm148, %vm196
  %vm245 = vmand %vm149, %vm197
  %vm246 = vmand %vm150, %vm198
  %vm247 = vmand %vm151, %vm199
  %vm248 = vmand %vm152, %vm200
  %vm249 = vmand %vm153, %vm201
  %vm250 = vmand %vm154, %vm202
  %vm251 = vmand %vm155, %vm203
  %v252 = vsel %vm204, 1.0, 0.0
  %v253 = vsel %vm205, 1.0, 0.0
  %v254 = vsel %vm206, 1.0, 0.0
  %v255 = vsel %vm207, 1.0, 0.0
  %v256 = vsel %vm208, 1.0, 0.0
  %v257 = vsel %vm209, 1.0, 0.0
  %v258 = vsel %vm210, 1.0, 0.0
  %v259 = vsel %vm211, 1.0, 0.0
  %v260 = vsel %vm212, 1.0, 0.0
  %v261 = vsel %vm213, 1.0, 0.0
  %v262 = vsel %vm214, 1.0, 0.0
  %v263 = vsel %vm215, 1.0, 0.0
  %v264 = vsel %vm216, 1.0, 0.0
  %v265 = vsel %vm217, 1.0, 0.0
  %v266 = vsel %vm218, 1.0, 0.0
  %v267 = vsel %vm219, 1.0, 0.0
  %v268 = vsel %vm220, 1.0, 0.0
  %v269 = vsel %vm221, 1.0, 0.0
  %v270 = vsel %vm222, 1.0, 0.0
  %v271 = vsel %vm223, 1.0, 0.0
  %v272 = vsel %vm224, 1.0, 0.0
  %v273 = vsel %vm225, 1.0, 0.0
  %v274 = vsel %vm226, 1.0, 0.0
  %v275 = vsel %vm227, 1.0, 0.0
  %v276 = vsel %vm228, 1.0, 0.0
  %v277 = vsel %vm229, 1.0, 0.0
  %v278 = vsel %vm230, 1.0, 0.0
  %v279 = vsel %vm231, 1.0, 0.0
  %v280 = vsel %vm232, 1.0, 0.0
  %v281 = vsel %vm233, 1.0, 0.0
  %v282 = vsel %vm234, 1.0, 0.0
  %v283 = vsel %vm235, 1.0, 0.0
  %v284 = vsel %vm236, 1.0, 0.0
  %v285 = vsel %vm237, 1.0, 0.0
  %v286 = vsel %vm238, 1.0, 0.0
  %v287 = vsel %vm239, 1.0, 0.0
  %v288 = vsel %vm240, 1.0, 0.0
  %v289 = vsel %vm241, 1.0, 0.0
  %v290 = vsel %vm242, 1.0, 0.0
  %v291 = vsel %vm243, 1.0, 0.0
  %v292 = vsel %vm244, 1.0, 0.0
  %v293 = vsel %vm245, 1.0, 0.0
  %v294 = vsel %vm246, 1.0, 0.0
  %v295 = vsel %vm247, 1.0, 0.0
  %v296 = vsel %vm248, 1.0, 0.0
  %v297 = vsel %vm249, 1.0, 0.0
  %v298 = vsel %vm250, 1.0, 0.0
  %v299 = vsel %vm251, 1.0, 0.0
  %v300 = vpack.c.bf16 %v255, %v252
  %v301 = vpack.c.bf16 %v256, %v253
  %v302 = vpack.c.bf16 %v257, %v254
  %v303 = vpack.c.bf16 %v261, %v258
  %v304 = vpack.c.bf16 %v262, %v259
  %v305 = vpack.c.bf16 %v263, %v260
  %v306 = vpack.c.bf16 %v267, %v264
  %v307 = vpack.c.bf16 %v268, %v265
  %v308 = vpack.c.bf16 %v269, %v266
  %v309 = vpack.c.bf16 %v273, %v270
  %v310 = vpack.c.bf16 %v274, %v271
  %v311 = vpack.c.bf16 %v275, %v272
  %v312 = vpack.c.bf16 %v279, %v276
  %v313 = vpack.c.bf16 %v280, %v277
  %v314 = vpack.c.bf16 %v281, %v278
  %v315 = vpack.c.bf16 %v285, %v282
  %v316 = vpack.c.bf16 %v286, %v283
  %v317 = vpack.c.bf16 %v287, %v284
  %v318 = vpack.c.bf16 %v291, %v288
  %v319 = vpack.c.bf16 %v292, %v289
  %v320 = vpack.c.bf16 %v293, %v290
  %v321 = vpack.c.bf16 %v297, %v294
  %v322 = vpack.c.bf16 %v298, %v295
  %v323 = vpack.c.bf16 %v299, %v296
  %v324 = vcvt.s32.f32 %v16
  %v325 = vsel %vm26, %v324, -1.0
  %v326 = vpack.c.bf16 %v325, %v325
  %327 = vmatprep.subr.bf16.mxu0 %v301
  %328 = vmatpush1.bf16.msra.mxu0 %v300
  %329 = vmatprep.subr.bf16.mxu0 %v304
  %330 = vmatpush1.bf16.msra.mxu0 %v303
  %331 = vmatprep.subr.bf16.mxu0 %v307
  %332 = vmatpush1.bf16.msra.mxu0 %v306
  %333 = vmatprep.subr.bf16.mxu0 %v310
  %334 = vmatpush1.bf16.msra.mxu0 %v309
  %335 = vmatprep.subr.bf16.mxu0 %v313
  %336 = vmatpush1.bf16.msra.mxu0 %v312
  %337 = vmatprep.subr.bf16.mxu0 %v316
  %338 = vmatpush1.bf16.msra.mxu0 %v315
  %339 = vmatprep.subr.bf16.mxu0 %v319
  %340 = vmatpush1.bf16.msra.mxu0 %v318
  %341 = vmatprep.subr.bf16.mxu0 %v322
  %342 = vmatpush1.bf16.msra.mxu0 %v321
  %343 = vmatprep.subr.bf16.mxu0 0
  %344 = vmatpush1.bf16.msra.mxu0 0
  %345 = vmatprep.subr.bf16.mxu0 0
  %346 = vmatpush1.bf16.msra.mxu0 0
  %347 = vmatprep.subr.bf16.mxu0 0
  %348 = vmatpush1.bf16.msra.mxu0 0
  %349 = vmatprep.subr.bf16.mxu0 0
  %350 = vmatpush1.bf16.msra.mxu0 0
  %351 = vmatprep.subr.bf16.mxu0 0
  %352 = vmatpush1.bf16.msra.mxu0 0
  %353 = vmatprep.subr.bf16.mxu0 0
  %354 = vmatpush1.bf16.msra.mxu0 0
  %355 = vmatprep.subr.bf16.mxu0 0
  %356 = vmatpush1.bf16.msra.mxu0 0
  %357 = vmatprep.subr.bf16.mxu0 0
  %358 = vmatpush1.bf16.msra.mxu0 0
  %359 = vmatprep.mubr.bf16.mxu0 0
  %360 = vmatmul.mubr.bf16.gmra.mrb[0].mxu0 %v326
  %v361 = vpop.f32.mrb[0].mxu0
  %v362 = vadd.f32 0.0, %v361
  %v363 = vpop.f32.mrb[0].mxu0
  %v364 = vadd.f32 0.0, %v363
  %v365 = vpop.f32.mrb[0].mxu0
  %v366 = vpop.f32.mrb[0].mxu0
  %367 = vdwg.mxu0
  %368 = vmatprep.subr.bf16.mxu0 0
  %369 = vmatpush1.bf16.msra.mxu0 %v302
  %370 = vmatprep.subr.bf16.mxu0 0
  %371 = vmatpush1.bf16.msra.mxu0 %v305
  %372 = vmatprep.subr.bf16.mxu0 0
  %373 = vmatpush1.bf16.msra.mxu0 %v308
  %374 = vmatprep.subr.bf16.mxu0 0
  %375 = vmatpush1.bf16.msra.mxu0 %v311
  %376 = vmatprep.subr.bf16.mxu0 0
  %377 = vmatpush1.bf16.msra.mxu0 %v314
  %378 = vmatprep.subr.bf16.mxu0 0
  %379 = vmatpush1.bf16.msra.mxu0 %v317
  %380 = vmatprep.subr.bf16.mxu0 0
  %381 = vmatpush1.bf16.msra.mxu0 %v320
  %382 = vmatprep.subr.bf16.mxu0 0
  %383 = vmatpush1.bf16.msra.mxu0 %v323
  %384 = vmatprep.subr.bf16.mxu0 0
  %385 = vmatpush1.bf16.msra.mxu0 0
  %386 = vmatprep.subr.bf16.mxu0 0
  %387 = vmatpush1.bf16.msra.mxu0 0
  %388 = vmatprep.subr.bf16.mxu0 0
  %389 = vmatpush1.bf16.msra.mxu0 0
  %390 = vmatprep.subr.bf16.mxu0 0
  %391 = vmatpush1.bf16.msra.mxu0 0
  %392 = vmatprep.subr.bf16.mxu0 0
  %393 = vmatpush1.bf16.msra.mxu0 0
  %394 = vmatprep.subr.bf16.mxu0 0
  %395 = vmatpush1.bf16.msra.mxu0 0
  %396 = vmatprep.subr.bf16.mxu0 0
  %397 = vmatpush1.bf16.msra.mxu0 0
  %398 = vmatprep.subr.bf16.mxu0 0
  %399 = vmatpush1.bf16.msra.mxu0 0
  %400 = vmatprep.mubr.bf16.mxu0 0
  %401 = vmatmul.mubr.bf16.gmra.mrb[0].mxu0 %v326
  %v402 = vpop.f32.mrb[0].mxu0
  %v403 = vadd.f32 0.0, %v402
  %v404 = vpop.f32.mrb[0].mxu0
  %v405 = vpop.f32.mrb[0].mxu0
  %v406 = vpop.f32.mrb[0].mxu0
  %407 = vdwg.mxu0
  %vm408 = vcmp.ge.f32.partialorder %v362, 0.0
  %vm409 = vcmp.ge.f32.partialorder %v364, 0.0
  %vm410 = vcmp.ge.f32.partialorder %v403, 0.0
  %v411 = vcvt.s32.f32 %v60
  %v412 = vcvt.s32.f32 %v61
  %v413 = vcvt.s32.f32 %v62
  %v414 = vcvt.s32.f32 %v63
  %v415 = vcvt.s32.f32 %v64
  %v416 = vcvt.s32.f32 %v65
  %v417 = vcvt.s32.f32 %v66
  %v418 = vcvt.s32.f32 %v67
  %v419 = vcvt.s32.f32 %v68
  %v420 = vcvt.s32.f32 %v69
  %v421 = vcvt.s32.f32 %v70
  %v422 = vcvt.s32.f32 %v71
  %v423 = vcvt.s32.f32 %v72
  %v424 = vcvt.s32.f32 %v73
  %v425 = vcvt.s32.f32 %v74
  %v426 = vcvt.s32.f32 %v75
  %v427 = vcvt.s32.f32 %v76
  %v428 = vcvt.s32.f32 %v77
  %v429 = vcvt.s32.f32 %v78
  %v430 = vcvt.s32.f32 %v79
  %v431 = vcvt.s32.f32 %v80
  %v432 = vcvt.s32.f32 %v81
  %v433 = vcvt.s32.f32 %v82
  %v434 = vcvt.s32.f32 %v83
  %v435 = vcvt.s32.f32 %v84
  %v436 = vcvt.s32.f32 %v85
  %v437 = vcvt.s32.f32 %v86
  %v438 = vcvt.s32.f32 %v87
  %v439 = vcvt.s32.f32 %v88
  %v440 = vcvt.s32.f32 %v89
  %v441 = vcvt.s32.f32 %v90
  %v442 = vcvt.s32.f32 %v91
  %v443 = vcvt.s32.f32 %v92
  %v444 = vcvt.s32.f32 %v93
  %v445 = vcvt.s32.f32 %v94
  %v446 = vcvt.s32.f32 %v95
  %v447 = vcvt.s32.f32 %v96
  %v448 = vcvt.s32.f32 %v97
  %v449 = vcvt.s32.f32 %v98
  %v450 = vcvt.s32.f32 %v99
  %v451 = vcvt.s32.f32 %v100
  %v452 = vcvt.s32.f32 %v101
  %v453 = vcvt.s32.f32 %v102
  %v454 = vcvt.s32.f32 %v103
  %v455 = vcvt.s32.f32 %v104
  %v456 = vcvt.s32.f32 %v105
  %v457 = vcvt.s32.f32 %v106
  %v458 = vcvt.s32.f32 %v107
  %v459 = vsel %vm204, %v411, 0.0
  %v460 = vsel %vm205, %v412, 0.0
  %v461 = vsel %vm206, %v413, 0.0
  %v462 = vsel %vm207, %v414, 0.0
  %v463 = vsel %vm208, %v415, 0.0
  %v464 = vsel %vm209, %v416, 0.0
  %v465 = vsel %vm210, %v417, 0.0
  %v466 = vsel %vm211, %v418, 0.0
  %v467 = vsel %vm212, %v419, 0.0
  %v468 = vsel %vm213, %v420, 0.0
  %v469 = vsel %vm214, %v421, 0.0
  %v470 = vsel %vm215, %v422, 0.0
  %v471 = vsel %vm216, %v423, 0.0
  %v472 = vsel %vm217, %v424, 0.0
  %v473 = vsel %vm218, %v425, 0.0
  %v474 = vsel %vm219, %v426, 0.0
  %v475 = vsel %vm220, %v427, 0.0
  %v476 = vsel %vm221, %v428, 0.0
  %v477 = vsel %vm222, %v429, 0.0
  %v478 = vsel %vm223, %v430, 0.0
  %v479 = vsel %vm224, %v431, 0.0
  %v480 = vsel %vm225, %v432, 0.0
  %v481 = vsel %vm226, %v433, 0.0
  %v482 = vsel %vm227, %v434, 0.0
  %v483 = vsel %vm228, %v435, 0.0
  %v484 = vsel %vm229, %v436, 0.0
  %v485 = vsel %vm230, %v437, 0.0
  %v486 = vsel %vm231, %v438, 0.0
  %v487 = vsel %vm232, %v439, 0.0
  %v488 = vsel %vm233, %v440, 0.0
  %v489 = vsel %vm234, %v441, 0.0
  %v490 = vsel %vm235, %v442, 0.0
  %v491 = vsel %vm236, %v443, 0.0
  %v492 = vsel %vm237, %v444, 0.0
  %v493 = vsel %vm238, %v445, 0.0
  %v494 = vsel %vm239, %v446, 0.0
  %v495 = vsel %vm240, %v447, 0.0
  %v496 = vsel %vm241, %v448, 0.0
  %v497 = vsel %vm242, %v449, 0.0
  %v498 = vsel %vm243, %v450, 0.0
  %v499 = vsel %vm244, %v451, 0.0
  %v500 = vsel %vm245, %v452, 0.0
  %v501 = vsel %vm246, %v453, 0.0
  %v502 = vsel %vm247, %v454, 0.0
  %v503 = vsel %vm248, %v455, 0.0
  %v504 = vsel %vm249, %v456, 0.0
  %v505 = vsel %vm250, %v457, 0.0
  %v506 = vsel %vm251, %v458, 0.0
  %v507 = vpack.c.bf16 %v462, %v459
  %v508 = vpack.c.bf16 %v463, %v460
  %v509 = vpack.c.bf16 %v464, %v461
  %v510 = vpack.c.bf16 %v468, %v465
  %v511 = vpack.c.bf16 %v469, %v466
  %v512 = vpack.c.bf16 %v470, %v467
  %v513 = vpack.c.bf16 %v474, %v471
  %v514 = vpack.c.bf16 %v475, %v472
  %v515 = vpack.c.bf16 %v476, %v473
  %v516 = vpack.c.bf16 %v480, %v477
  %v517 = vpack.c.bf16 %v481, %v478
  %v518 = vpack.c.bf16 %v482, %v479
  %v519 = vpack.c.bf16 %v486, %v483
  %v520 = vpack.c.bf16 %v487, %v484
  %v521 = vpack.c.bf16 %v488, %v485
  %v522 = vpack.c.bf16 %v492, %v489
  %v523 = vpack.c.bf16 %v493, %v490
  %v524 = vpack.c.bf16 %v494, %v491
  %v525 = vpack.c.bf16 %v498, %v495
  %v526 = vpack.c.bf16 %v499, %v496
  %v527 = vpack.c.bf16 %v500, %v497
  %v528 = vpack.c.bf16 %v504, %v501
  %v529 = vpack.c.bf16 %v505, %v502
  %v530 = vpack.c.bf16 %v506, %v503
  %531 = vmatprep.subr.bf16.mxu0 %v508
  %532 = vmatpush1.bf16.msra.mxu0 %v507
  %533 = vmatprep.subr.bf16.mxu0 %v511
  %534 = vmatpush1.bf16.msra.mxu0 %v510
  %535 = vmatprep.subr.bf16.mxu0 %v514
  %536 = vmatpush1.bf16.msra.mxu0 %v513
  %537 = vmatprep.subr.bf16.mxu0 %v517
  %538 = vmatpush1.bf16.msra.mxu0 %v516
  %539 = vmatprep.subr.bf16.mxu0 %v520
  %540 = vmatpush1.bf16.msra.mxu0 %v519
  %541 = vmatprep.subr.bf16.mxu0 %v523
  %542 = vmatpush1.bf16.msra.mxu0 %v522
  %543 = vmatprep.subr.bf16.mxu0 %v526
  %544 = vmatpush1.bf16.msra.mxu0 %v525
  %545 = vmatprep.subr.bf16.mxu0 %v529
  %546 = vmatpush1.bf16.msra.mxu0 %v528
  %547 = vmatprep.subr.bf16.mxu0 0
  %548 = vmatpush1.bf16.msra.mxu0 0
  %549 = vmatprep.subr.bf16.mxu0 0
  %550 = vmatpush1.bf16.msra.mxu0 0
  %551 = vmatprep.subr.bf16.mxu0 0
  %552 = vmatpush1.bf16.msra.mxu0 0
  %553 = vmatprep.subr.bf16.mxu0 0
  %554 = vmatpush1.bf16.msra.mxu0 0
  %555 = vmatprep.subr.bf16.mxu0 0
  %556 = vmatpush1.bf16.msra.mxu0 0
  %557 = vmatprep.subr.bf16.mxu0 0
  %558 = vmatpush1.bf16.msra.mxu0 0
  %559 = vmatprep.subr.bf16.mxu0 0
  %560 = vmatpush1.bf16.msra.mxu0 0
  %561 = vmatprep.subr.bf16.mxu0 0
  %562 = vmatpush1.bf16.msra.mxu0 0
  %563 = vmatprep.mubr.bf16.mxu0 0
  %564 = vmatmul.mubr.bf16.gmra.mrb[0].mxu0 1065369472
  %v565 = vpop.f32.mrb[0].mxu0
  %v566 = vadd.f32 0.0, %v565
  %v567 = vpop.f32.mrb[0].mxu0
  %v568 = vadd.f32 0.0, %v567
  %v569 = vpop.f32.mrb[0].mxu0
  %v570 = vpop.f32.mrb[0].mxu0
  %571 = vdwg.mxu0
  %572 = vmatprep.subr.bf16.mxu0 0
  %573 = vmatpush1.bf16.msra.mxu0 %v509
  %574 = vmatprep.subr.bf16.mxu0 0
  %575 = vmatpush1.bf16.msra.mxu0 %v512
  %576 = vmatprep.subr.bf16.mxu0 0
  %577 = vmatpush1.bf16.msra.mxu0 %v515
  %578 = vmatprep.subr.bf16.mxu0 0
  %579 = vmatpush1.bf16.msra.mxu0 %v518
  %580 = vmatprep.subr.bf16.mxu0 0
  %581 = vmatpush1.bf16.msra.mxu0 %v521
  %582 = vmatprep.subr.bf16.mxu0 0
  %583 = vmatpush1.bf16.msra.mxu0 %v524
  %584 = vmatprep.subr.bf16.mxu0 0
  %585 = vmatpush1.bf16.msra.mxu0 %v527
  %586 = vmatprep.subr.bf16.mxu0 0
  %587 = vmatpush1.bf16.msra.mxu0 %v530
  %588 = vmatprep.subr.bf16.mxu0 0
  %589 = vmatpush1.bf16.msra.mxu0 0
  %590 = vmatprep.subr.bf16.mxu0 0
  %591 = vmatpush1.bf16.msra.mxu0 0
  %592 = vmatprep.subr.bf16.mxu0 0
  %593 = vmatpush1.bf16.msra.mxu0 0
  %594 = vmatprep.subr.bf16.mxu0 0
  %595 = vmatpush1.bf16.msra.mxu0 0
  %596 = vmatprep.subr.bf16.mxu0 0
  %597 = vmatpush1.bf16.msra.mxu0 0
  %598 = vmatprep.subr.bf16.mxu0 0
  %599 = vmatpush1.bf16.msra.mxu0 0
  %600 = vmatprep.subr.bf16.mxu0 0
  %601 = vmatpush1.bf16.msra.mxu0 0
  %602 = vmatprep.subr.bf16.mxu0 0
  %603 = vmatpush1.bf16.msra.mxu0 0
  %604 = vmatprep.mubr.bf16.mxu0 0
  %605 = vmatmul.mubr.bf16.gmra.mrb[0].mxu0 1065369472
  %v606 = vpop.f32.mrb[0].mxu0
  %v607 = vadd.f32 0.0, %v606
  %v608 = vpop.f32.mrb[0].mxu0
  %v609 = vpop.f32.mrb[0].mxu0
  %v610 = vpop.f32.mrb[0].mxu0
  %611 = vdwg.mxu0
  %v612 = vlaneseq
  %v613 = vshrl.u32 %v612, 7
  %v614 = vsub.s32 0, %v613
  %v615 = vrot.slane %v566, %v614
  %v616 = vlaneseq
  %v617 = vshrl.u32 %v616, 7
  %v618 = vsub.s32 0, %v617
  %v619 = vrot.slane %v568, %v618
  %v620 = vlaneseq
  %v621 = vshrl.u32 %v620, 7
  %v622 = vsub.s32 0, %v621
  %v623 = vrot.slane %v607, %v622
  %vm624 = vcmp.eq.f32.partialorder %v362, %v615
  %vm625 = vcmp.eq.f32.partialorder %v364, %v619
  %vm626 = vcmp.eq.f32.partialorder %v403, %v623
  %627 = vrot.lane.b32.xlu0 %v13, 1
  %v628 = vpop.permute.xlu0 %627
  %629 = vrot.lane.b32.xlu0 %v14, 1
  %v630 = vpop.permute.xlu0 %629
  %631 = vrot.lane.b32.xlu0 %v15, 1
  %v632 = vpop.permute.xlu0 %631
  %vm633 = vcmp.lt.s32.totalorder %v20, 1
  %v634 = vsel %vm633, %v630, %v632
  %v635 = vsel %vm633, %v628, %v630
  %v636 = vsel %vm633, %v632, %v628
  %637 = vrot.lane.b32.xlu0 %v13, 127
  %v638 = vpop.permute.xlu0 %637
  %639 = vrot.lane.b32.xlu0 %v14, 127
  %v640 = vpop.permute.xlu0 %639
  %641 = vrot.lane.b32.xlu0 %v15, 127
  %v642 = vpop.permute.xlu0 %641
  %vm643 = vcmp.lt.s32.totalorder %v20, 127
  %v644 = vsel %vm643, %v640, %v642
  %v645 = vsel %vm643, %v638, %v640
  %v646 = vsel %vm643, %v642, %v638
  %v647 = vmax.f32 %v636, %v645
  %v648 = vmax.f32 %v635, %v644
  %v649 = vmax.f32 %v634, %v646
  %v650 = vmax.f32 %v13, %v647
  %v651 = vmax.f32 %v14, %v648
  %v652 = vmax.f32 %v15, %v649
  %v653 = vsub.f32 %v13, %v650
  %v654 = vsub.f32 %v14, %v651
  %v655 = vsub.f32 %v15, %v652
  %v656 = vmul.f32 %v653, 1.442695
  %v657 = vpow.pop %v656
  %v658 = vmul.f32 %v654, 1.442695
  %v659 = vpow.pop %v658
  %v660 = vmul.f32 %v655, 1.442695
  %v661 = vpow.pop %v660
  %v662 = vsub.f32 %v636, %v650
  %v663 = vsub.f32 %v635, %v651
  %v664 = vsub.f32 %v634, %v652
  %v665 = vmul.f32 %v662, 1.442695
  %v666 = vpow.pop %v665
  %v667 = vmul.f32 %v663, 1.442695
  %v668 = vpow.pop %v667
  %v669 = vmul.f32 %v664, 1.442695
  %v670 = vpow.pop %v669
  %v671 = vadd.f32 %v657, %v666
  %v672 = vadd.f32 %v659, %v668
  %v673 = vadd.f32 %v661, %v670
  %v674 = vsub.f32 %v645, %v650
  %v675 = vsub.f32 %v644, %v651
  %v676 = vsub.f32 %v646, %v652
  %v677 = vmul.f32 %v674, 1.442695
  %v678 = vpow.pop %v677
  %v679 = vmul.f32 %v675, 1.442695
  %v680 = vpow.pop %v679
  %v681 = vmul.f32 %v676, 1.442695
  %v682 = vpow.pop %v681
  %v683 = vadd.f32 %v671, %v678
  %v684 = vadd.f32 %v672, %v680
  %v685 = vadd.f32 %v673, %v682
  %v686 = vlog2.pop %v683
  %v687 = vmul.f32 %v686, 0.6931472
  %v688 = vlog2.pop %v684
  %v689 = vmul.f32 %v688, 0.6931472
  %v690 = vlog2.pop %v685
  %v691 = vmul.f32 %v690, 0.6931472
  %v692 = vadd.f32 %v650, %v687
  %v693 = vadd.f32 %v651, %v689
  %v694 = vadd.f32 %v652, %v691
  %vm695 = vcmp.eq.f32.partialorder %v566, 1.0
  %vm696 = vcmp.eq.f32.partialorder %v568, 1.0
  %vm697 = vcmp.eq.f32.partialorder %v607, 1.0
  %v698 = vsel %vm695, 1, 0
  %v699 = vsel %vm696, 1, 0
  %v700 = vsel %vm697, 1, 0
  %v701 = vlaneseq
  %v702 = vshrl.u32 %v701, 7
  %v703 = vsub.s32 0, %v702
  %v704 = vrot.slane %v698, %v703
  %v705 = vlaneseq
  %v706 = vshrl.u32 %v705, 7
  %v707 = vsub.s32 0, %v706
  %v708 = vrot.slane %v699, %v707
  %v709 = vlaneseq
  %v710 = vshrl.u32 %v709, 7
  %v711 = vsub.s32 0, %v710
  %v712 = vrot.slane %v700, %v711
  %vm713 = vcmp.eq.s32.totalorder %v704, 1
  %vm714 = vcmp.eq.s32.totalorder %v708, 1
  %vm715 = vcmp.eq.s32.totalorder %v712, 1
  %vm716 = vmand %vm713, %vm408
  %vm717 = vmand %vm714, %vm409
  %vm718 = vmand %vm715, %vm410
  %v719 = vsel %vm716, %v692, 0.0
  %v720 = vsel %vm717, %v693, 0.0
  %v721 = vsel %vm718, %v694, 0.0
  %v722 = vsel %vm624, %v13, 0.0
  %v723 = vsel %vm625, %v14, 0.0
  %v724 = vsel %vm626, %v15, 0.0
  %v725 = vsub.f32 %v719, %v722
  %v726 = vsub.f32 %v720, %v723
  %v727 = vsub.f32 %v721, %v724
  %v728 = vrot.slane %v725, 4
  %v729 = vadd.f32 %v725, %v728
  %v730 = vrot.slane %v729, 2
  %v731 = vadd.f32 %v729, %v730
  %v732 = vrot.slane %v731, 1
  %v733 = vadd.f32 %v731, %v732
  %v734 = vrot.slane %v726, 4
  %v735 = vadd.f32 %v726, %v734
  %v736 = vrot.slane %v735, 2
  %v737 = vadd.f32 %v735, %v736
  %v738 = vrot.slane %v737, 1
  %v739 = vadd.f32 %v737, %v738
  %v740 = vrot.slane %v727, 4
  %v741 = vadd.f32 %v727, %v740
  %v742 = vrot.slane %v741, 2
  %v743 = vadd.f32 %v741, %v742
  %v744 = vrot.slane %v743, 1
  %v745 = vadd.f32 %v743, %v744
  %v749 = vcombine.low %v733, %v739
  %v751 = vunpack.c.l.s4 1966171168
  %v752 = vunpack.c.0.s8 %v751
  %v753 = vlaneseq
  %v754 = vshrl.u32 %v753, 7
  %v755 = vsub.s32 %v752, %v754
  %v756 = vrot.slane %v749, %v755
  %v758 = vunpack.c.l.s4 1966171168
  %v759 = vunpack.c.0.s8 %v758
  %v760 = vlaneseq
  %v761 = vshrl.u32 %v760, 7
  %v762 = vsub.s32 %v759, %v761
  %v763 = vrot.slane %v745, %v762
  %v764 = vcombine.low %v756, %v763
  %v766 = vunpack.c.l.s4 1966171168
  %v767 = vunpack.c.0.s8 %v766
  %v768 = vlaneseq
  %v769 = vshrl.u32 %v768, 7
  %v770 = vsub.s32 %v767, %v769
  %v771 = vrot.slane %v764, %v770
  %v773 = vlaneseq
  %vm774 = vcmp.ge.s32.totalorder %v773, 0
  %vm775 = vcmp.lt.s32.totalorder %v773, 384
  %vm776 = vmand %vm774, %vm775
  %777 = vst.msk [vmem:[%s2] sm:$0x7] %vm776, %v771
  // Predicated region
  $region10: #{_ce_loss_pallas.1} parent=0 // pred_check
    _
  $region11: #{_ce_loss_pallas.1} parent=0 // pred_check_branch
    %779 = sbr.rel (0) target = $region13
  $region12: #{_ce_loss_pallas.1} parent=0 // pred_region
    _
  $region13: #{_ce_loss_pallas.1} parent=0 // pred_fallthru
    _
  // Predicated region
  $region14: #{_ce_loss_pallas.1} parent=0 // pred_check
    _
  $region15: #{_ce_loss_pallas.1} parent=0 // pred_check_branch
    %781 = sbr.rel (0) target = $region17
  $region16: #{_ce_loss_pallas.1} parent=0 // pred_region
    _
  $region17: #{_ce_loss_pallas.1} parent=0 // pred_fallthru
    _

</llo_original>
